<compile_context>
chip_gen: v7x
topology: tpu7x:2x2x1
jax: 0.10.0
libtpu: 0.0.40
codegen_flags: <defaults>
</compile_context>

<pallas_src>
import functools

import jax
import jax.numpy as jnp
from jax import lax
from jax.experimental import pallas as pl
from jax.experimental.pallas import tpu as pltpu


def _conv_tanh_kernel(x_ref, w_ref, b_ref, o_ref, *, KH, KW, W):
    # x_ref: (1, Cin, HW)       flattened input image (lane-dense spatial axis)
    # w_ref: (KH*KW, Cout, Cin) per-tap weight matrices (tap t = kh*KW + kw)
    # b_ref: (Cout, 1)          bias column
    # o_ref: (1, Cout, HW)      padded output; valid at p = oh*W + ow with
    #                           oh < OH, ow < OW (wrapper slices the rest off)
    x = x_ref[0]                          # (Cin, HW)
    hw = x.shape[-1]
    cout = o_ref.shape[1]

    # Fold the bias into the accumulator init (no separate broadcast add).
    acc = jnp.broadcast_to(b_ref[...], (cout, hw)).astype(jnp.float32)

    for kh in range(KH):
        for kw in range(KW):
            off = kh * W + kw
            # rolled[:, p] = x[:, (p + off) % HW]  ->  roll by (HW - off).
            # XLU lane rotate on a lane-dense slab: no strided-slice relayout.
            xt = x if off == 0 else pltpu.roll(x, shift=hw - off, axis=1)
            acc = acc + jnp.dot(w_ref[kh * KW + kw], xt,
                                preferred_element_type=jnp.float32)

    o_ref[0] = jnp.tanh(acc).astype(o_ref.dtype)


def conv2d_tanh_pallas(x_flat, w_taps, b_col, *, KH, KW, W):
    N, Cin, HW = x_flat.shape
    T, Cout, Cin_w = w_taps.shape
    assert T == KH * KW and Cin_w == Cin

    kernel = functools.partial(_conv_tanh_kernel, KH=KH, KW=KW, W=W)
    return pl.pallas_call(
        kernel,
        out_shape=jax.ShapeDtypeStruct((N, Cout, HW), x_flat.dtype),
        grid=(N,),  # one image per grid step; both TCs used on v7x
        in_specs=[
            pl.BlockSpec((1, Cin, HW), lambda n: (n, 0, 0)),
            pl.BlockSpec((T, Cout, Cin), lambda n: (0, 0, 0)),
            pl.BlockSpec((Cout, 1), lambda n: (0, 0)),
        ],
        out_specs=pl.BlockSpec((1, Cout, HW), lambda n: (n, 0, 0)),
        compiler_params=pltpu.CompilerParams(
            dimension_semantics=("parallel",)),
    )(x_flat, w_taps, b_col)


def model_tanh_forward(x_nchw, w_oihw, bias):
    """Matches ModelTanh.forward: tanh(Conv2d(14->12, k=3)(x)); NCHW in/out."""
    N, Cin, H, W = x_nchw.shape
    Cout, Cin_w, KH, KW = w_oihw.shape
    assert Cin == Cin_w
    OH, OW = H - KH + 1, W - KW + 1

    x_flat = x_nchw.reshape(N, Cin, H * W)            # free reshape, no copy
    # Per-tap (Cout, Cin) matrices; tiny (9*12*14 floats), transpose is trivial.
    w_taps = jnp.transpose(w_oihw, (2, 3, 0, 1)).reshape(KH * KW, Cout, Cin)
    b_col = bias.reshape(Cout, 1)

    y_pad = conv2d_tanh_pallas(x_flat, w_taps, b_col, KH=KH, KW=KW, W=W)
    # (N, Cout, H*W) -> (N, Cout, H, W); drop invalid tail rows/cols (free slice).
    return y_pad.reshape(N, Cout, H, W)[:, :, :OH, :OW]


if __name__ == "__main__":
    key = jax.random.PRNGKey(0)
    k_x, k_w, k_b = jax.random.split(key, 3)

    # Small shapes consistent with the module (Cin=14, Cout=12, k=3).
    N, Cin, H, W = 2, 14, 16, 16
    Cout, KH, KW = 12, 3, 3

    x = jax.random.normal(k_x, (N, Cin, H, W), dtype=jnp.float32)

    # Deterministic PyTorch-style Conv2d init: U(-1/sqrt(fan_in), 1/sqrt(fan_in)).
    fan_in = Cin * KH * KW
    bound = 1.0 / jnp.sqrt(jnp.float32(fan_in))
    w_oihw = jax.random.uniform(k_w, (Cout, Cin, KH, KW),
                                minval=-bound, maxval=bound, dtype=jnp.float32)
    bias = jax.random.uniform(k_b, (Cout,), minval=-bound, maxval=bound,
                              dtype=jnp.float32)

    fwd = jax.jit(model_tanh_forward)
    out = jax.block_until_ready(fwd(x, w_oihw, bias))

    # Reference check against XLA conv (NCHW, valid padding) + tanh.
    ref = jnp.tanh(
        lax.conv_general_dilated(
            x, w_oihw, window_strides=(1, 1), padding="VALID",
            dimension_numbers=("NCHW", "OIHW", "NCHW"))
        + bias.reshape(1, Cout, 1, 1))
    assert out.shape == (N, Cout, H - KH + 1, W - KW + 1)
    assert jnp.max(jnp.abs(out - ref)) < 1e-4

    print("KERNEL_OK")
</pallas_src>

<mosaic_0001>
module attributes {stable_mosaic.version = 11 : i64} {
  func.func @_conv_tanh_kernel(%arg0: i32, %arg1: memref<1x14x256xf32, #tpu.memory_space<vmem>>, %arg2: memref<9x12x14xf32, #tpu.memory_space<vmem>>, %arg3: memref<12x1xf32, #tpu.memory_space<vmem>>, %arg4: memref<1x12x256xf32, #tpu.memory_space<vmem>>) attributes {dimension_semantics = [#tpu.dimension_semantics<parallel>], iteration_bounds = array<i64: 2>, scalar_prefetch = 0 : i64, scratch_operands = 0 : i64, tpu.core_type = #tpu.core_type<tc>, window_params = [{transform_indices = @transform_0, window_bounds = array<i64: 1, 14, 256>}, {pipeline_mode = #tpu.pipeline_mode<synchronous>, transform_indices = @transform_1, window_bounds = array<i64: 9, 12, 14>}, {pipeline_mode = #tpu.pipeline_mode<synchronous>, transform_indices = @transform_2, window_bounds = array<i64: 12, 1>}, {transform_indices = @transform_3, window_bounds = array<i64: 1, 12, 256>}]} {
    %c0 = arith.constant 0 : index
    %c0_0 = arith.constant 0 : index
    %c0_1 = arith.constant 0 : index
    %0 = vector.load %arg1[%c0, %c0_0, %c0_1] : memref<1x14x256xf32, #tpu.memory_space<vmem>>, vector<1x14x256xf32>
    %1 = vector.shape_cast %0 : vector<1x14x256xf32> to vector<14x256xf32>
    %c0_2 = arith.constant 0 : index
    %c0_3 = arith.constant 0 : index
    %2 = vector.load %arg3[%c0_2, %c0_3] : memref<12x1xf32, #tpu.memory_space<vmem>>, vector<12x1xf32>
    %3 = vector.shape_cast %2 : vector<12x1xf32> to vector<12x1xf32>
    %4 = vector.broadcast %3 : vector<12x1xf32> to vector<12x256xf32>
    %c0_4 = arith.constant 0 : index
    %c0_5 = arith.constant 0 : index
    %c0_6 = arith.constant 0 : index
    %5 = vector.load %arg2[%c0_4, %c0_5, %c0_6] : memref<9x12x14xf32, #tpu.memory_space<vmem>>, vector<1x12x14xf32>
    %6 = vector.shape_cast %5 : vector<1x12x14xf32> to vector<12x14xf32>
    %cst = arith.constant dense<0.000000e+00> : vector<12x256xf32>
    %7 = tpu.matmul %6, %1, %cst {dimension_numbers = #tpu.dot_dimension_numbers<[1], [0], [0], [1], [0, 0, 1, 1], [], []>} : vector<12x14xf32>, vector<14x256xf32>, vector<12x256xf32> -> vector<12x256xf32>
    %8 = arith.addf %4, %7 : vector<12x256xf32>
    %c255_i32 = arith.constant 255 : i32
    %9 = tpu.dynamic_rotate %1 by %c255_i32 dim 1 : vector<14x256xf32>, i32 -> vector<14x256xf32>
    %c1 = arith.constant 1 : index
    %c0_7 = arith.constant 0 : index
    %c0_8 = arith.constant 0 : index
    %10 = vector.load %arg2[%c1, %c0_7, %c0_8] : memref<9x12x14xf32, #tpu.memory_space<vmem>>, vector<1x12x14xf32>
    %11 = vector.shape_cast %10 : vector<1x12x14xf32> to vector<12x14xf32>
    %cst_9 = arith.constant dense<0.000000e+00> : vector<12x256xf32>
    %12 = tpu.matmul %11, %9, %cst_9 {dimension_numbers = #tpu.dot_dimension_numbers<[1], [0], [0], [1], [0, 0, 1, 1], [], []>} : vector<12x14xf32>, vector<14x256xf32>, vector<12x256xf32> -> vector<12x256xf32>
    %13 = arith.addf %8, %12 : vector<12x256xf32>
    %c254_i32 = arith.constant 254 : i32
    %14 = tpu.dynamic_rotate %1 by %c254_i32 dim 1 : vector<14x256xf32>, i32 -> vector<14x256xf32>
    %c2 = arith.constant 2 : index
    %c0_10 = arith.constant 0 : index
    %c0_11 = arith.constant 0 : index
    %15 = vector.load %arg2[%c2, %c0_10, %c0_11] : memref<9x12x14xf32, #tpu.memory_space<vmem>>, vector<1x12x14xf32>
    %16 = vector.shape_cast %15 : vector<1x12x14xf32> to vector<12x14xf32>
    %cst_12 = arith.constant dense<0.000000e+00> : vector<12x256xf32>
    %17 = tpu.matmul %16, %14, %cst_12 {dimension_numbers = #tpu.dot_dimension_numbers<[1], [0], [0], [1], [0, 0, 1, 1], [], []>} : vector<12x14xf32>, vector<14x256xf32>, vector<12x256xf32> -> vector<12x256xf32>
    %18 = arith.addf %13, %17 : vector<12x256xf32>
    %c240_i32 = arith.constant 240 : i32
    %19 = tpu.dynamic_rotate %1 by %c240_i32 dim 1 : vector<14x256xf32>, i32 -> vector<14x256xf32>
    %c3 = arith.constant 3 : index
    %c0_13 = arith.constant 0 : index
    %c0_14 = arith.constant 0 : index
    %20 = vector.load %arg2[%c3, %c0_13, %c0_14] : memref<9x12x14xf32, #tpu.memory_space<vmem>>, vector<1x12x14xf32>
    %21 = vector.shape_cast %20 : vector<1x12x14xf32> to vector<12x14xf32>
    %cst_15 = arith.constant dense<0.000000e+00> : vector<12x256xf32>
    %22 = tpu.matmul %21, %19, %cst_15 {dimension_numbers = #tpu.dot_dimension_numbers<[1], [0], [0], [1], [0, 0, 1, 1], [], []>} : vector<12x14xf32>, vector<14x256xf32>, vector<12x256xf32> -> vector<12x256xf32>
    %23 = arith.addf %18, %22 : vector<12x256xf32>
    %c239_i32 = arith.constant 239 : i32
    %24 = tpu.dynamic_rotate %1 by %c239_i32 dim 1 : vector<14x256xf32>, i32 -> vector<14x256xf32>
    %c4 = arith.constant 4 : index
    %c0_16 = arith.constant 0 : index
    %c0_17 = arith.constant 0 : index
    %25 = vector.load %arg2[%c4, %c0_16, %c0_17] : memref<9x12x14xf32, #tpu.memory_space<vmem>>, vector<1x12x14xf32>
    %26 = vector.shape_cast %25 : vector<1x12x14xf32> to vector<12x14xf32>
    %cst_18 = arith.constant dense<0.000000e+00> : vector<12x256xf32>
    %27 = tpu.matmul %26, %24, %cst_18 {dimension_numbers = #tpu.dot_dimension_numbers<[1], [0], [0], [1], [0, 0, 1, 1], [], []>} : vector<12x14xf32>, vector<14x256xf32>, vector<12x256xf32> -> vector<12x256xf32>
    %28 = arith.addf %23, %27 : vector<12x256xf32>
    %c238_i32 = arith.constant 238 : i32
    %29 = tpu.dynamic_rotate %1 by %c238_i32 dim 1 : vector<14x256xf32>, i32 -> vector<14x256xf32>
    %c5 = arith.constant 5 : index
    %c0_19 = arith.constant 0 : index
    %c0_20 = arith.constant 0 : index
    %30 = vector.load %arg2[%c5, %c0_19, %c0_20] : memref<9x12x14xf32, #tpu.memory_space<vmem>>, vector<1x12x14xf32>
    %31 = vector.shape_cast %30 : vector<1x12x14xf32> to vector<12x14xf32>
    %cst_21 = arith.constant dense<0.000000e+00> : vector<12x256xf32>
    %32 = tpu.matmul %31, %29, %cst_21 {dimension_numbers = #tpu.dot_dimension_numbers<[1], [0], [0], [1], [0, 0, 1, 1], [], []>} : vector<12x14xf32>, vector<14x256xf32>, vector<12x256xf32> -> vector<12x256xf32>
    %33 = arith.addf %28, %32 : vector<12x256xf32>
    %c224_i32 = arith.constant 224 : i32
    %34 = tpu.dynamic_rotate %1 by %c224_i32 dim 1 : vector<14x256xf32>, i32 -> vector<14x256xf32>
    %c6 = arith.constant 6 : index
    %c0_22 = arith.constant 0 : index
    %c0_23 = arith.constant 0 : index
    %35 = vector.load %arg2[%c6, %c0_22, %c0_23] : memref<9x12x14xf32, #tpu.memory_space<vmem>>, vector<1x12x14xf32>
    %36 = vector.shape_cast %35 : vector<1x12x14xf32> to vector<12x14xf32>
    %cst_24 = arith.constant dense<0.000000e+00> : vector<12x256xf32>
    %37 = tpu.matmul %36, %34, %cst_24 {dimension_numbers = #tpu.dot_dimension_numbers<[1], [0], [0], [1], [0, 0, 1, 1], [], []>} : vector<12x14xf32>, vector<14x256xf32>, vector<12x256xf32> -> vector<12x256xf32>
    %38 = arith.addf %33, %37 : vector<12x256xf32>
    %c223_i32 = arith.constant 223 : i32
    %39 = tpu.dynamic_rotate %1 by %c223_i32 dim 1 : vector<14x256xf32>, i32 -> vector<14x256xf32>
    %c7 = arith.constant 7 : index
    %c0_25 = arith.constant 0 : index
    %c0_26 = arith.constant 0 : index
    %40 = vector.load %arg2[%c7, %c0_25, %c0_26] : memref<9x12x14xf32, #tpu.memory_space<vmem>>, vector<1x12x14xf32>
    %41 = vector.shape_cast %40 : vector<1x12x14xf32> to vector<12x14xf32>
    %cst_27 = arith.constant dense<0.000000e+00> : vector<12x256xf32>
    %42 = tpu.matmul %41, %39, %cst_27 {dimension_numbers = #tpu.dot_dimension_numbers<[1], [0], [0], [1], [0, 0, 1, 1], [], []>} : vector<12x14xf32>, vector<14x256xf32>, vector<12x256xf32> -> vector<12x256xf32>
    %43 = arith.addf %38, %42 : vector<12x256xf32>
    %c222_i32 = arith.constant 222 : i32
    %44 = tpu.dynamic_rotate %1 by %c222_i32 dim 1 : vector<14x256xf32>, i32 -> vector<14x256xf32>
    %c8 = arith.constant 8 : index
    %c0_28 = arith.constant 0 : index
    %c0_29 = arith.constant 0 : index
    %45 = vector.load %arg2[%c8, %c0_28, %c0_29] : memref<9x12x14xf32, #tpu.memory_space<vmem>>, vector<1x12x14xf32>
    %46 = vector.shape_cast %45 : vector<1x12x14xf32> to vector<12x14xf32>
    %cst_30 = arith.constant dense<0.000000e+00> : vector<12x256xf32>
    %47 = tpu.matmul %46, %44, %cst_30 {dimension_numbers = #tpu.dot_dimension_numbers<[1], [0], [0], [1], [0, 0, 1, 1], [], []>} : vector<12x14xf32>, vector<14x256xf32>, vector<12x256xf32> -> vector<12x256xf32>
    %48 = arith.addf %43, %47 : vector<12x256xf32>
    %49 = math.tanh %48 : vector<12x256xf32>
    %c0_31 = arith.constant 0 : index
    %c0_32 = arith.constant 0 : index
    %c0_33 = arith.constant 0 : index
    %50 = vector.load %arg4[%c0_31, %c0_32, %c0_33] : memref<1x12x256xf32, #tpu.memory_space<vmem>>, vector<1x12x256xf32>
    %51 = vector.shape_cast %50 : vector<1x12x256xf32> to vector<12x256xf32>
    %52 = vector.shape_cast %49 : vector<12x256xf32> to vector<1x12x256xf32>
    tpu.vector_store %arg4[%c0_31, %c0_32, %c0_33], %52 {strides = array<i32>} : memref<1x12x256xf32, #tpu.memory_space<vmem>>, vector<1x12x256xf32>,
    return
  }
  func.func @transform_0(%arg0: i32) -> (i32, i32, i32) {
    %c0_i32 = arith.constant 0 : i32
    %c0_i32_0 = arith.constant 0 : i32
    %c0_i32_1 = arith.constant 0 : i32
    return %arg0, %c0_i32, %c0_i32_0 : i32, i32, i32
  }
  func.func @transform_1(%arg0: i32) -> (i32, i32, i32) {
    %c0_i32 = arith.constant 0 : i32
    %c0_i32_0 = arith.constant 0 : i32
    %c0_i32_1 = arith.constant 0 : i32
    %c0_i32_2 = arith.constant 0 : i32
    return %c0_i32, %c0_i32_0, %c0_i32_1 : i32, i32, i32
  }
  func.func @transform_2(%arg0: i32) -> (i32, i32) {
    %c0_i32 = arith.constant 0 : i32
    %c0_i32_0 = arith.constant 0 : i32
    %c0_i32_1 = arith.constant 0 : i32
    return %c0_i32, %c0_i32_0 : i32, i32
  }
  func.func @transform_3(%arg0: i32) -> (i32, i32, i32) {
    %c0_i32 = arith.constant 0 : i32
    %c0_i32_0 = arith.constant 0 : i32
    %c0_i32_1 = arith.constant 0 : i32
    return %arg0, %c0_i32, %c0_i32_0 : i32, i32, i32
  }
}

</mosaic_0001>

<llo_original>
// kernel: model_tanh_forward.1
$region0: #{model_tanh_forward.1}
  #allocation0 [shape = 'u32[]', space=smem, size = 0x4, offset = 0x4, fixed_abs, tag = 'smem constant byte address 0x4 - core index']
  #allocation1 [shape = 'u32[144,128]{1,0:T(1,128)}', space=vmem, size = 0x12000, scoped, tag = 'internal scratch']
  %s0 = inlined_call_operand.vmem [shape: f32[2,14,256], index: 0, kind: input, shape index: {}]
  %s1 = inlined_call_operand.vmem [shape: f32[9,12,14], index: 1, kind: input, shape index: {}]
  %s2 = inlined_call_operand.vmem [shape: f32[12,1], index: 2, kind: input, shape index: {}]
  %s3 = inlined_call_operand.vmem [shape: f32[2,12,256], index: 3, kind: output, shape index: {}]
  %s4 = sld [smem:[#allocation0]]
  $region45: #{model_tanh_forward.1} parent=0
    _
  %s6 = ssub.s32 1, %s4
  %s7 = scalar_select 0, %s6, %s4
  loop: start=0, step=1, limit=4
  $region2: #{model_tanh_forward.1} parent=0 // loop_pre_header
    _
  $region3: #{model_tanh_forward.1} parent=0 // loop_header
    %s9 = sphi 0, %s13
    %p10 = scmp.ge.s32.totalorder %s9, 4
    %s19 = sphi 0, %s21
    %s22 = sphi 0, %s19
    %s23 = sphi 0, %s22
    %s39 = sphi 0, %s23
    %s43 = sphi 0, %s43
    %s45 = sphi 0, %s43
    %s46 = sphi 0, %s45
    %s60 = sphi 0, %s46
    %s64 = sphi 0, %s64
    %s66 = sphi 0, %s64
    %s67 = sphi 0, %s66
    %s81 = sphi 0, %s67
    %s87 = sphi 0, %s89
    %s90 = sphi 0, %s87
    %s91 = sphi 0, %s90
    %s107 = sphi 0, %s91
  $region4: #{model_tanh_forward.1} parent=0 // loop_header_branch
    %12 = sbr.rel (%p10) target = $region8
  $region5: #{model_tanh_forward.1} parent=0 // loop_body
    %s14 = ssub.s32 %s9, 1
    %s15 = ssub.s32 %s9, 2
    %s16 = sadd.s32 %s9, 1
    %s17 = ssub.s32 %s9, %s16
    %p18 = scmp.eq.s32.totalorder %s17, 0
    %s20 = sadd.s32 %s19, 1
    %s21 = scalar_select %p18, %s19, %s20
    %p24 = pneg %p18
    %p25 = scmp.eq.s32.totalorder %s9, 1
    %p26 = por %p24, %p25
    %p27 = scmp.ne.s32.totalorder %s19, %s22
    %p28 = scmp.eq.s32.totalorder %s9, 0
    %p29 = por %p27, %p28
    %p30 = scmp.ne.s32.totalorder %s19, %s22
    %p31 = scmp.eq.s32.totalorder %s14, 1
    %p32 = por %p30, %p31
    %p33 = scmp.ne.s32.totalorder %s22, %s23
    %p34 = scmp.eq.s32.totalorder %s14, 0
    %p35 = por %p33, %p34
    %p36 = scmp.ne.s32.totalorder %s22, %s23
    %p37 = scmp.eq.s32.totalorder %s15, 1
    %p38 = por %p36, %p37
    %p40 = scmp.ne.s32.totalorder %s23, %s39
    %p41 = scmp.eq.s32.totalorder %s15, 0
    %p42 = por %p40, %p41
    %s44 = sadd.s32 %s43, 1
    %p47 = scmp.eq.s32.totalorder %s9, 1
    %p48 = scmp.ne.s32.totalorder %s43, %s45
    %p49 = scmp.eq.s32.totalorder %s9, 0
    %p50 = por %p48, %p49
    %p51 = scmp.ne.s32.totalorder %s43, %s45
    %p52 = scmp.eq.s32.totalorder %s14, 1
    %p53 = por %p51, %p52
    %p54 = scmp.ne.s32.totalorder %s45, %s46
    %p55 = scmp.eq.s32.totalorder %s14, 0
    %p56 = por %p54, %p55
    %p57 = scmp.ne.s32.totalorder %s45, %s46
    %p58 = scmp.eq.s32.totalorder %s15, 1
    %p59 = por %p57, %p58
    %p61 = scmp.ne.s32.totalorder %s46, %s60
    %p62 = scmp.eq.s32.totalorder %s15, 0
    %p63 = por %p61, %p62
    %s65 = sadd.s32 %s64, 1
    %p68 = scmp.eq.s32.totalorder %s9, 1
    %p69 = scmp.ne.s32.totalorder %s64, %s66
    %p70 = scmp.eq.s32.totalorder %s9, 0
    %p71 = por %p69, %p70
    %p72 = scmp.ne.s32.totalorder %s64, %s66
    %p73 = scmp.eq.s32.totalorder %s14, 1
    %p74 = por %p72, %p73
    %p75 = scmp.ne.s32.totalorder %s66, %s67
    %p76 = scmp.eq.s32.totalorder %s14, 0
    %p77 = por %p75, %p76
    %p78 = scmp.ne.s32.totalorder %s66, %s67
    %p79 = scmp.eq.s32.totalorder %s15, 1
    %p80 = por %p78, %p79
    %p82 = scmp.ne.s32.totalorder %s67, %s81
    %p83 = scmp.eq.s32.totalorder %s15, 0
    %p84 = por %p82, %p83
    %s85 = ssub.s32 %s9, %s16
    %p86 = scmp.eq.s32.totalorder %s85, 0
    %s88 = sadd.s32 %s87, 1
    %s89 = scalar_select %p86, %s87, %s88
    %p92 = pneg %p86
    %p93 = scmp.eq.s32.totalorder %s9, 1
    %p94 = por %p92, %p93
    %p95 = scmp.ne.s32.totalorder %s87, %s90
    %p96 = scmp.eq.s32.totalorder %s9, 0
    %p97 = por %p95, %p96
    %p98 = scmp.ne.s32.totalorder %s87, %s90
    %p99 = scmp.eq.s32.totalorder %s14, 1
    %p100 = por %p98, %p99
    %p101 = scmp.ne.s32.totalorder %s90, %s91
    %p102 = scmp.eq.s32.totalorder %s14, 0
    %p103 = por %p101, %p102
    %p104 = scmp.ne.s32.totalorder %s90, %s91
    %p105 = scmp.eq.s32.totalorder %s15, 1
    %p106 = por %p104, %p105
    %p108 = scmp.ne.s32.totalorder %s91, %s107
    %p109 = scmp.eq.s32.totalorder %s15, 0
    %p110 = por %p108, %p109
    %p111 = scmp.le.s32.totalorder 1, %s9
    %p112 = scmp.lt.s32.totalorder %s9, 3
    %p113 = pnand %p111, %p112
    %p114 = pneg %p113
    // Predicated region
    $region9: #{model_tanh_forward.1} parent=5 // pred_check
      _
    $region10: #{model_tanh_forward.1} parent=5 // pred_check_branch
      %116 = sbr.rel (%p113) target = $region12
    $region11: #{model_tanh_forward.1} parent=5 // pred_region
      %s117 = ssub.s32 %s9, 1
      // Predicated region
      $region13: #{model_tanh_forward.1} parent=11 // pred_check
        %p118 = pneg %p56
      $region14: #{model_tanh_forward.1} parent=11 // pred_check_branch
        %120 = sbr.rel (%p118) target = $region16
      $region15: #{model_tanh_forward.1} parent=11 // pred_region
        _
      $region16: #{model_tanh_forward.1} parent=11 // pred_fallthru
        _
      // Predicated region
      $region17: #{model_tanh_forward.1} parent=11 // pred_check
        %p121 = pneg %p77
      $region18: #{model_tanh_forward.1} parent=11 // pred_check_branch
        %123 = sbr.rel (%p121) target = $region20
      $region19: #{model_tanh_forward.1} parent=11 // pred_region
        _
      $region20: #{model_tanh_forward.1} parent=11 // pred_fallthru
        _
    $region12: #{model_tanh_forward.1} parent=5 // pred_fallthru
      _
    %p124 = scmp.lt.s32.totalorder %s9, 2
    // Predicated region
    $region21: #{model_tanh_forward.1} parent=5 // pred_check
      %p125 = pneg %p124
    $region22: #{model_tanh_forward.1} parent=5 // pred_check_branch
      %127 = sbr.rel (%p125) target = $region24
    $region23: #{model_tanh_forward.1} parent=5 // pred_region
      // Predicated region
      $region25: #{model_tanh_forward.1} parent=23 // pred_check
        %p128 = pneg %p29
      $region26: #{model_tanh_forward.1} parent=23 // pred_check_branch
        %130 = sbr.rel (%p128) target = $region28
      $region27: #{model_tanh_forward.1} parent=23 // pred_region
        %p131 = scmp.lt.s32.totalorder %s9, 1
        %s132 = scalar_select %p131, %s9, 1
        %s133 = smul.addr %s132, 4
        %s134 = smul.addr %s133, 8
        %s135 = scalar_lea.vmem %s0, %s134
      $region28: #{model_tanh_forward.1} parent=23 // pred_fallthru
        _
    $region24: #{model_tanh_forward.1} parent=5 // pred_fallthru
      _
    %p136 = scmp.le.s32.totalorder 1, %s9
    %p137 = scmp.lt.s32.totalorder %s9, 3
    %p138 = pnand %p136, %p137
    %p139 = pneg %p138
    // Predicated region
    $region29: #{model_tanh_forward.1} parent=5 // pred_check
      _
    $region30: #{model_tanh_forward.1} parent=5 // pred_check_branch
      %141 = sbr.rel (%p138) target = $region32
    $region31: #{model_tanh_forward.1} parent=5 // pred_region
      %s142 = ssub.s32 %s9, 1
      %p143 = scmp.lt.s32.totalorder %s14, 1
      %s144 = scalar_select %p143, %s14, 1
      %s145 = smul.addr %s144, 4
      %s146 = smul.addr %s145, 8
      %s147 = scalar_lea.vmem %s0, %s146
      %p148 = pneg %p35
      %p149 = pneg %p32
      %p150 = pneg %p56
      %p151 = pneg %p53
      %p152 = pneg %p77
      %p153 = pneg %p74
      %p154 = pneg %p103
      %p155 = pneg %p100
      %p156 = scmp.lt.s32.totalorder %s14, 1
      %s157 = scalar_select %p156, %s14, 1
      %s158 = smul.addr %s157, 4
      %s159 = smul.addr %s158, 8
      %s160 = scalar_lea.vmem %s3, %s159
      %p161 = scmp.lt.s32.totalorder %s14, 1
      %s162 = scalar_select %p161, %s14, 1
      %s163 = smul.addr %s162, 4
      %s164 = smul.addr %s163, 8
      %s165 = scalar_lea.vmem %s0, %s164
      %p166 = scmp.lt.s32.totalorder %s14, 1
      %s167 = scalar_select %p166, %s14, 1
      %s168 = smul.addr %s167, 4
      %s169 = smul.addr %s168, 8
      %s170 = scalar_lea.vmem %s3, %s169
      %v171 = vld [vmem:[%s165] sm:$0xff]
      %v172 = vld [vmem:[%s165 + $0x8] sm:$0xff]
      %v173 = vld [vmem:[%s165 + $0x10] sm:$0x3f]
      %v174 = vld [vmem:[%s165 + $0x18] sm:$0x3f]
      %v175 = vld [vmem:[%s2] sm:$0xff]
      %v176 = vld [vmem:[%s2 + $0x8] sm:$0xf]
      %178 = vset.pattern.permute.xlu0 0
      %179 = vperm.xlu0 %178, %v175
      %v180 = vpop.permute.xlu0 %179
      %183 = vset.pattern.permute.xlu0 0
      %184 = vperm.xlu0 %183, %v176
      %v185 = vpop.permute.xlu0 %184
      %v187 = vld [vmem:[%s1] sm:$0xff]
      %v188 = vld [vmem:[%s1 + $0x8] sm:$0xf]
      %vm189 = vcmask 113664
      %v191 = vsel %vm189, %v187, 0
      %v194 = vsel %vm189, %v188, 0
      %vm196 = vcmask 1045504
      %v198 = vsel %vm196, %v173, 0
      %v201 = vsel %vm196, %v174, 0
      %203 = vmatprep.subr.mxu0 %v172
      %204 = vmatpush1.msra.mxu0 %v171
      %205 = vmatprep.subr.mxu0 %v201
      %206 = vmatpush1.msra.mxu0 %v198
      %207 = vmatprep.subr.mxu0 0.0
      %208 = vmatpush1.msra.mxu0 0.0
      %209 = vmatprep.subr.mxu0 0.0
      %210 = vmatpush1.msra.mxu0 0.0
      %211 = vmatprep.subr.mxu0 0.0
      %212 = vmatpush1.msra.mxu0 0.0
      %213 = vmatprep.subr.mxu0 0.0
      %214 = vmatpush1.msra.mxu0 0.0
      %215 = vmatprep.subr.mxu0 0.0
      %216 = vmatpush1.msra.mxu0 0.0
      %217 = vmatprep.subr.mxu0 0.0
      %218 = vmatpush1.msra.mxu0 0.0
      %219 = vmatprep.subr.mxu0 0.0
      %220 = vmatpush1.msra.mxu0 0.0
      %221 = vmatprep.subr.mxu0 0.0
      %222 = vmatpush1.msra.mxu0 0.0
      %223 = vmatprep.subr.mxu0 0.0
      %224 = vmatpush1.msra.mxu0 0.0
      %225 = vmatprep.subr.mxu0 0.0
      %226 = vmatpush1.msra.mxu0 0.0
      %227 = vmatprep.subr.mxu0 0.0
      %228 = vmatpush1.msra.mxu0 0.0
      %229 = vmatprep.subr.mxu0 0.0
      %230 = vmatpush1.msra.mxu0 0.0
      %231 = vmatprep.subr.mxu0 0.0
      %232 = vmatpush1.msra.mxu0 0.0
      %233 = vmatprep.subr.mxu0 0.0
      %234 = vmatpush1.msra.mxu0 0.0
      %235 = vmatprep.subr.mxu0 0.0
      %236 = vmatpush1.msra.mxu0 0.0
      %237 = vmatprep.subr.mxu0 0.0
      %238 = vmatpush1.msra.mxu0 0.0
      %239 = vmatprep.subr.mxu0 0.0
      %240 = vmatpush1.msra.mxu0 0.0
      %241 = vmatprep.subr.mxu0 0.0
      %242 = vmatpush1.msra.mxu0 0.0
      %243 = vmatprep.subr.mxu0 0.0
      %244 = vmatpush1.msra.mxu0 0.0
      %245 = vmatprep.subr.mxu0 0.0
      %246 = vmatpush1.msra.mxu0 0.0
      %247 = vmatprep.subr.mxu0 0.0
      %248 = vmatpush1.msra.mxu0 0.0
      %249 = vmatprep.subr.mxu0 0.0
      %250 = vmatpush1.msra.mxu0 0.0
      %251 = vmatprep.subr.mxu0 0.0
      %252 = vmatpush1.msra.mxu0 0.0
      %253 = vmatprep.subr.mxu0 0.0
      %254 = vmatpush1.msra.mxu0 0.0
      %255 = vmatprep.subr.mxu0 0.0
      %256 = vmatpush1.msra.mxu0 0.0
      %257 = vmatprep.subr.mxu0 0.0
      %258 = vmatpush1.msra.mxu0 0.0
      %259 = vmatprep.subr.mxu0 0.0
      %260 = vmatpush1.msra.mxu0 0.0
      %261 = vmatprep.subr.mxu0 0.0
      %262 = vmatpush1.msra.mxu0 0.0
      %263 = vmatprep.subr.mxu0 0.0
      %264 = vmatpush1.msra.mxu0 0.0
      %265 = vmatprep.subr.mxu0 0.0
      %266 = vmatpush1.msra.mxu0 0.0
      %267 = vmatprep.mubr.f32.mxu0 0.0
      %268 = vmatmul.mubr.f32.gmra.mrb[0].mxu0 %v191
      %v269 = vpop.f32.mrb[0].mxu0
      %v270 = vadd.f32 0.0, %v269
      %v271 = vpop.f32.mrb[0].mxu0
      %v272 = vadd.f32 0.0, %v271
      %273 = vmatprep.mubr.f32.mxu0 0.0
      %274 = vmatmul.mubr.f32.gmra.mrb[0].mxu0 %v194
      %v275 = vpop.f32.mrb[0].mxu0
      %v276 = vadd.f32 0.0, %v275
      %v277 = vpop.f32.mrb[0].mxu0
      %v278 = vadd.f32 0.0, %v277
      %279 = vdwg.mxu0
      %v280 = vadd.f32 %v180, %v270
      %v281 = vadd.f32 %v180, %v272
      %v282 = vadd.f32 %v185, %v276
      %v283 = vadd.f32 %v185, %v278
      %284 = vrot.lane.b32.xlu0 %v171, 127
      %v285 = vpop.permute.xlu0 %284
      %286 = vrot.lane.b32.xlu0 %v173, 127
      %v287 = vpop.permute.xlu0 %286
      %288 = vrot.lane.b32.xlu0 %v172, 127
      %v289 = vpop.permute.xlu0 %288
      %290 = vrot.lane.b32.xlu0 %v174, 127
      %v291 = vpop.permute.xlu0 %290
      %v292 = vlaneseq
      %v293 = vand.u32 %v292, 127
      %vm294 = vcmp.lt.s32.totalorder %v293, 127
      %v295 = vsel %vm294, %v285, %v289
      %v296 = vsel %vm294, %v287, %v291
      %v297 = vsel %vm294, %v289, %v285
      %v298 = vsel %vm294, %v291, %v287
      %s299 = scalar_lea.vmem %s1, 16
      %v300 = vld [vmem:[%s299] sm:$0xff]
      %v301 = vld [vmem:[%s299 + $0x8] sm:$0xf]
      %v303 = vsel %vm189, %v300, 0
      %v306 = vsel %vm189, %v301, 0
      %v309 = vsel %vm196, %v296, 0
      %v312 = vsel %vm196, %v298, 0
      %314 = vmatprep.subr.mxu0 %v297
      %315 = vmatpush1.msra.mxu0 %v295
      %316 = vmatprep.subr.mxu0 %v312
      %317 = vmatpush1.msra.mxu0 %v309
      %318 = vmatprep.subr.mxu0 0.0
      %319 = vmatpush1.msra.mxu0 0.0
      %320 = vmatprep.subr.mxu0 0.0
      %321 = vmatpush1.msra.mxu0 0.0
      %322 = vmatprep.subr.mxu0 0.0
      %323 = vmatpush1.msra.mxu0 0.0
      %324 = vmatprep.subr.mxu0 0.0
      %325 = vmatpush1.msra.mxu0 0.0
      %326 = vmatprep.subr.mxu0 0.0
      %327 = vmatpush1.msra.mxu0 0.0
      %328 = vmatprep.subr.mxu0 0.0
      %329 = vmatpush1.msra.mxu0 0.0
      %330 = vmatprep.subr.mxu0 0.0
      %331 = vmatpush1.msra.mxu0 0.0
      %332 = vmatprep.subr.mxu0 0.0
      %333 = vmatpush1.msra.mxu0 0.0
      %334 = vmatprep.subr.mxu0 0.0
      %335 = vmatpush1.msra.mxu0 0.0
      %336 = vmatprep.subr.mxu0 0.0
      %337 = vmatpush1.msra.mxu0 0.0
      %338 = vmatprep.subr.mxu0 0.0
      %339 = vmatpush1.msra.mxu0 0.0
      %340 = vmatprep.subr.mxu0 0.0
      %341 = vmatpush1.msra.mxu0 0.0
      %342 = vmatprep.subr.mxu0 0.0
      %343 = vmatpush1.msra.mxu0 0.0
      %344 = vmatprep.subr.mxu0 0.0
      %345 = vmatpush1.msra.mxu0 0.0
      %346 = vmatprep.subr.mxu0 0.0
      %347 = vmatpush1.msra.mxu0 0.0
      %348 = vmatprep.subr.mxu0 0.0
      %349 = vmatpush1.msra.mxu0 0.0
      %350 = vmatprep.subr.mxu0 0.0
      %351 = vmatpush1.msra.mxu0 0.0
      %352 = vmatprep.subr.mxu0 0.0
      %353 = vmatpush1.msra.mxu0 0.0
      %354 = vmatprep.subr.mxu0 0.0
      %355 = vmatpush1.msra.mxu0 0.0
      %356 = vmatprep.subr.mxu0 0.0
      %357 = vmatpush1.msra.mxu0 0.0
      %358 = vmatprep.subr.mxu0 0.0
      %359 = vmatpush1.msra.mxu0 0.0
      %360 = vmatprep.subr.mxu0 0.0
      %361 = vmatpush1.msra.mxu0 0.0
      %362 = vmatprep.subr.mxu0 0.0
      %363 = vmatpush1.msra.mxu0 0.0
      %364 = vmatprep.subr.mxu0 0.0
      %365 = vmatpush1.msra.mxu0 0.0
      %366 = vmatprep.subr.mxu0 0.0
      %367 = vmatpush1.msra.mxu0 0.0
      %368 = vmatprep.subr.mxu0 0.0
      %369 = vmatpush1.msra.mxu0 0.0
      %370 = vmatprep.subr.mxu0 0.0
      %371 = vmatpush1.msra.mxu0 0.0
      %372 = vmatprep.subr.mxu0 0.0
      %373 = vmatpush1.msra.mxu0 0.0
      %374 = vmatprep.subr.mxu0 0.0
      %375 = vmatpush1.msra.mxu0 0.0
      %376 = vmatprep.subr.mxu0 0.0
      %377 = vmatpush1.msra.mxu0 0.0
      %378 = vmatprep.mubr.f32.mxu0 0.0
      %379 = vmatmul.mubr.f32.gmra.mrb[0].mxu0 %v303
      %v380 = vpop.f32.mrb[0].mxu0
      %v381 = vadd.f32 0.0, %v380
      %v382 = vpop.f32.mrb[0].mxu0
      %v383 = vadd.f32 0.0, %v382
      %384 = vmatprep.mubr.f32.mxu0 0.0
      %385 = vmatmul.mubr.f32.gmra.mrb[0].mxu0 %v306
      %v386 = vpop.f32.mrb[0].mxu0
      %v387 = vadd.f32 0.0, %v386
      %v388 = vpop.f32.mrb[0].mxu0
      %v389 = vadd.f32 0.0, %v388
      %390 = vdwg.mxu0
      %v391 = vadd.f32 %v280, %v381
      %v392 = vadd.f32 %v281, %v383
      %v393 = vadd.f32 %v282, %v387
      %v394 = vadd.f32 %v283, %v389
      %395 = vrot.lane.b32.xlu0 %v171, 126
      %v396 = vpop.permute.xlu0 %395
      %397 = vrot.lane.b32.xlu0 %v173, 126
      %v398 = vpop.permute.xlu0 %397
      %399 = vrot.lane.b32.xlu0 %v172, 126
      %v400 = vpop.permute.xlu0 %399
      %401 = vrot.lane.b32.xlu0 %v174, 126
      %v402 = vpop.permute.xlu0 %401
      %vm403 = vcmp.lt.s32.totalorder %v293, 126
      %v404 = vsel %vm403, %v396, %v400
      %v405 = vsel %vm403, %v398, %v402
      %v406 = vsel %vm403, %v400, %v396
      %v407 = vsel %vm403, %v402, %v398
      %s408 = scalar_lea.vmem %s1, 32
      %v409 = vld [vmem:[%s408] sm:$0xff]
      %v410 = vld [vmem:[%s408 + $0x8] sm:$0xf]
      %v412 = vsel %vm189, %v409, 0
      %v415 = vsel %vm189, %v410, 0
      %v418 = vsel %vm196, %v405, 0
      %v421 = vsel %vm196, %v407, 0
      %423 = vmatprep.subr.mxu0 %v406
      %424 = vmatpush1.msra.mxu0 %v404
      %425 = vmatprep.subr.mxu0 %v421
      %426 = vmatpush1.msra.mxu0 %v418
      %427 = vmatprep.subr.mxu0 0.0
      %428 = vmatpush1.msra.mxu0 0.0
      %429 = vmatprep.subr.mxu0 0.0
      %430 = vmatpush1.msra.mxu0 0.0
      %431 = vmatprep.subr.mxu0 0.0
      %432 = vmatpush1.msra.mxu0 0.0
      %433 = vmatprep.subr.mxu0 0.0
      %434 = vmatpush1.msra.mxu0 0.0
      %435 = vmatprep.subr.mxu0 0.0
      %436 = vmatpush1.msra.mxu0 0.0
      %437 = vmatprep.subr.mxu0 0.0
      %438 = vmatpush1.msra.mxu0 0.0
      %439 = vmatprep.subr.mxu0 0.0
      %440 = vmatpush1.msra.mxu0 0.0
      %441 = vmatprep.subr.mxu0 0.0
      %442 = vmatpush1.msra.mxu0 0.0
      %443 = vmatprep.subr.mxu0 0.0
      %444 = vmatpush1.msra.mxu0 0.0
      %445 = vmatprep.subr.mxu0 0.0
      %446 = vmatpush1.msra.mxu0 0.0
      %447 = vmatprep.subr.mxu0 0.0
      %448 = vmatpush1.msra.mxu0 0.0
      %449 = vmatprep.subr.mxu0 0.0
      %450 = vmatpush1.msra.mxu0 0.0
      %451 = vmatprep.subr.mxu0 0.0
      %452 = vmatpush1.msra.mxu0 0.0
      %453 = vmatprep.subr.mxu0 0.0
      %454 = vmatpush1.msra.mxu0 0.0
      %455 = vmatprep.subr.mxu0 0.0
      %456 = vmatpush1.msra.mxu0 0.0
      %457 = vmatprep.subr.mxu0 0.0
      %458 = vmatpush1.msra.mxu0 0.0
      %459 = vmatprep.subr.mxu0 0.0
      %460 = vmatpush1.msra.mxu0 0.0
      %461 = vmatprep.subr.mxu0 0.0
      %462 = vmatpush1.msra.mxu0 0.0
      %463 = vmatprep.subr.mxu0 0.0
      %464 = vmatpush1.msra.mxu0 0.0
      %465 = vmatprep.subr.mxu0 0.0
      %466 = vmatpush1.msra.mxu0 0.0
      %467 = vmatprep.subr.mxu0 0.0
      %468 = vmatpush1.msra.mxu0 0.0
      %469 = vmatprep.subr.mxu0 0.0
      %470 = vmatpush1.msra.mxu0 0.0
      %471 = vmatprep.subr.mxu0 0.0
      %472 = vmatpush1.msra.mxu0 0.0
      %473 = vmatprep.subr.mxu0 0.0
      %474 = vmatpush1.msra.mxu0 0.0
      %475 = vmatprep.subr.mxu0 0.0
      %476 = vmatpush1.msra.mxu0 0.0
      %477 = vmatprep.subr.mxu0 0.0
      %478 = vmatpush1.msra.mxu0 0.0
      %479 = vmatprep.subr.mxu0 0.0
      %480 = vmatpush1.msra.mxu0 0.0
      %481 = vmatprep.subr.mxu0 0.0
      %482 = vmatpush1.msra.mxu0 0.0
      %483 = vmatprep.subr.mxu0 0.0
      %484 = vmatpush1.msra.mxu0 0.0
      %485 = vmatprep.subr.mxu0 0.0
      %486 = vmatpush1.msra.mxu0 0.0
      %487 = vmatprep.mubr.f32.mxu0 0.0
      %488 = vmatmul.mubr.f32.gmra.mrb[0].mxu0 %v412
      %v489 = vpop.f32.mrb[0].mxu0
      %v490 = vadd.f32 0.0, %v489
      %v491 = vpop.f32.mrb[0].mxu0
      %v492 = vadd.f32 0.0, %v491
      %493 = vmatprep.mubr.f32.mxu0 0.0
      %494 = vmatmul.mubr.f32.gmra.mrb[0].mxu0 %v415
      %v495 = vpop.f32.mrb[0].mxu0
      %v496 = vadd.f32 0.0, %v495
      %v497 = vpop.f32.mrb[0].mxu0
      %v498 = vadd.f32 0.0, %v497
      %499 = vdwg.mxu0
      %v500 = vadd.f32 %v391, %v490
      %v501 = vadd.f32 %v392, %v492
      %v502 = vadd.f32 %v393, %v496
      %v503 = vadd.f32 %v394, %v498
      %504 = vrot.lane.b32.xlu0 %v171, 112
      %v505 = vpop.permute.xlu0 %504
      %506 = vrot.lane.b32.xlu0 %v173, 112
      %v507 = vpop.permute.xlu0 %506
      %508 = vrot.lane.b32.xlu0 %v172, 112
      %v509 = vpop.permute.xlu0 %508
      %510 = vrot.lane.b32.xlu0 %v174, 112
      %v511 = vpop.permute.xlu0 %510
      %vm512 = vcmp.lt.s32.totalorder %v293, 112
      %v513 = vsel %vm512, %v505, %v509
      %v514 = vsel %vm512, %v507, %v511
      %v515 = vsel %vm512, %v509, %v505
      %v516 = vsel %vm512, %v511, %v507
      %s517 = scalar_lea.vmem %s1, 48
      %v518 = vld [vmem:[%s517] sm:$0xff]
      %v519 = vld [vmem:[%s517 + $0x8] sm:$0xf]
      %v521 = vsel %vm189, %v518, 0
      %v524 = vsel %vm189, %v519, 0
      %v527 = vsel %vm196, %v514, 0
      %v530 = vsel %vm196, %v516, 0
      %532 = vmatprep.subr.mxu0 %v515
      %533 = vmatpush1.msra.mxu0 %v513
      %534 = vmatprep.subr.mxu0 %v530
      %535 = vmatpush1.msra.mxu0 %v527
      %536 = vmatprep.subr.mxu0 0.0
      %537 = vmatpush1.msra.mxu0 0.0
      %538 = vmatprep.subr.mxu0 0.0
      %539 = vmatpush1.msra.mxu0 0.0
      %540 = vmatprep.subr.mxu0 0.0
      %541 = vmatpush1.msra.mxu0 0.0
      %542 = vmatprep.subr.mxu0 0.0
      %543 = vmatpush1.msra.mxu0 0.0
      %544 = vmatprep.subr.mxu0 0.0
      %545 = vmatpush1.msra.mxu0 0.0
      %546 = vmatprep.subr.mxu0 0.0
      %547 = vmatpush1.msra.mxu0 0.0
      %548 = vmatprep.subr.mxu0 0.0
      %549 = vmatpush1.msra.mxu0 0.0
      %550 = vmatprep.subr.mxu0 0.0
      %551 = vmatpush1.msra.mxu0 0.0
      %552 = vmatprep.subr.mxu0 0.0
      %553 = vmatpush1.msra.mxu0 0.0
      %554 = vmatprep.subr.mxu0 0.0
      %555 = vmatpush1.msra.mxu0 0.0
      %556 = vmatprep.subr.mxu0 0.0
      %557 = vmatpush1.msra.mxu0 0.0
      %558 = vmatprep.subr.mxu0 0.0
      %559 = vmatpush1.msra.mxu0 0.0
      %560 = vmatprep.subr.mxu0 0.0
      %561 = vmatpush1.msra.mxu0 0.0
      %562 = vmatprep.subr.mxu0 0.0
      %563 = vmatpush1.msra.mxu0 0.0
      %564 = vmatprep.subr.mxu0 0.0
      %565 = vmatpush1.msra.mxu0 0.0
      %566 = vmatprep.subr.mxu0 0.0
      %567 = vmatpush1.msra.mxu0 0.0
      %568 = vmatprep.subr.mxu0 0.0
      %569 = vmatpush1.msra.mxu0 0.0
      %570 = vmatprep.subr.mxu0 0.0
      %571 = vmatpush1.msra.mxu0 0.0
      %572 = vmatprep.subr.mxu0 0.0
      %573 = vmatpush1.msra.mxu0 0.0
      %574 = vmatprep.subr.mxu0 0.0
      %575 = vmatpush1.msra.mxu0 0.0
      %576 = vmatprep.subr.mxu0 0.0
      %577 = vmatpush1.msra.mxu0 0.0
      %578 = vmatprep.subr.mxu0 0.0
      %579 = vmatpush1.msra.mxu0 0.0
      %580 = vmatprep.subr.mxu0 0.0
      %581 = vmatpush1.msra.mxu0 0.0
      %582 = vmatprep.subr.mxu0 0.0
      %583 = vmatpush1.msra.mxu0 0.0
      %584 = vmatprep.subr.mxu0 0.0
      %585 = vmatpush1.msra.mxu0 0.0
      %586 = vmatprep.subr.mxu0 0.0
      %587 = vmatpush1.msra.mxu0 0.0
      %588 = vmatprep.subr.mxu0 0.0
      %589 = vmatpush1.msra.mxu0 0.0
      %590 = vmatprep.subr.mxu0 0.0
      %591 = vmatpush1.msra.mxu0 0.0
      %592 = vmatprep.subr.mxu0 0.0
      %593 = vmatpush1.msra.mxu0 0.0
      %594 = vmatprep.subr.mxu0 0.0
      %595 = vmatpush1.msra.mxu0 0.0
      %596 = vmatprep.mubr.f32.mxu0 0.0
      %597 = vmatmul.mubr.f32.gmra.mrb[0].mxu0 %v521
      %v598 = vpop.f32.mrb[0].mxu0
      %v599 = vadd.f32 0.0, %v598
      %v600 = vpop.f32.mrb[0].mxu0
      %v601 = vadd.f32 0.0, %v600
      %602 = vmatprep.mubr.f32.mxu0 0.0
      %603 = vmatmul.mubr.f32.gmra.mrb[0].mxu0 %v524
      %v604 = vpop.f32.mrb[0].mxu0
      %v605 = vadd.f32 0.0, %v604
      %v606 = vpop.f32.mrb[0].mxu0
      %v607 = vadd.f32 0.0, %v606
      %608 = vdwg.mxu0
      %v609 = vadd.f32 %v500, %v599
      %v610 = vadd.f32 %v501, %v601
      %v611 = vadd.f32 %v502, %v605
      %v612 = vadd.f32 %v503, %v607
      %613 = vrot.lane.b32.xlu0 %v171, 111
      %v614 = vpop.permute.xlu0 %613
      %615 = vrot.lane.b32.xlu0 %v173, 111
      %v616 = vpop.permute.xlu0 %615
      %617 = vrot.lane.b32.xlu0 %v172, 111
      %v618 = vpop.permute.xlu0 %617
      %619 = vrot.lane.b32.xlu0 %v174, 111
      %v620 = vpop.permute.xlu0 %619
      %vm621 = vcmp.lt.s32.totalorder %v293, 111
      %v622 = vsel %vm621, %v614, %v618
      %v623 = vsel %vm621, %v616, %v620
      %v624 = vsel %vm621, %v618, %v614
      %v625 = vsel %vm621, %v620, %v616
      %s626 = scalar_lea.vmem %s1, 64
      %v627 = vld [vmem:[%s626] sm:$0xff]
      %v628 = vld [vmem:[%s626 + $0x8] sm:$0xf]
      %v630 = vsel %vm189, %v627, 0
      %v633 = vsel %vm189, %v628, 0
      %v636 = vsel %vm196, %v623, 0
      %v639 = vsel %vm196, %v625, 0
      %641 = vmatprep.subr.mxu0 %v624
      %642 = vmatpush1.msra.mxu0 %v622
      %643 = vmatprep.subr.mxu0 %v639
      %644 = vmatpush1.msra.mxu0 %v636
      %645 = vmatprep.subr.mxu0 0.0
      %646 = vmatpush1.msra.mxu0 0.0
      %647 = vmatprep.subr.mxu0 0.0
      %648 = vmatpush1.msra.mxu0 0.0
      %649 = vmatprep.subr.mxu0 0.0
      %650 = vmatpush1.msra.mxu0 0.0
      %651 = vmatprep.subr.mxu0 0.0
      %652 = vmatpush1.msra.mxu0 0.0
      %653 = vmatprep.subr.mxu0 0.0
      %654 = vmatpush1.msra.mxu0 0.0
      %655 = vmatprep.subr.mxu0 0.0
      %656 = vmatpush1.msra.mxu0 0.0
      %657 = vmatprep.subr.mxu0 0.0
      %658 = vmatpush1.msra.mxu0 0.0
      %659 = vmatprep.subr.mxu0 0.0
      %660 = vmatpush1.msra.mxu0 0.0
      %661 = vmatprep.subr.mxu0 0.0
      %662 = vmatpush1.msra.mxu0 0.0
      %663 = vmatprep.subr.mxu0 0.0
      %664 = vmatpush1.msra.mxu0 0.0
      %665 = vmatprep.subr.mxu0 0.0
      %666 = vmatpush1.msra.mxu0 0.0
      %667 = vmatprep.subr.mxu0 0.0
      %668 = vmatpush1.msra.mxu0 0.0
      %669 = vmatprep.subr.mxu0 0.0
      %670 = vmatpush1.msra.mxu0 0.0
      %671 = vmatprep.subr.mxu0 0.0
      %672 = vmatpush1.msra.mxu0 0.0
      %673 = vmatprep.subr.mxu0 0.0
      %674 = vmatpush1.msra.mxu0 0.0
      %675 = vmatprep.subr.mxu0 0.0
      %676 = vmatpush1.msra.mxu0 0.0
      %677 = vmatprep.subr.mxu0 0.0
      %678 = vmatpush1.msra.mxu0 0.0
      %679 = vmatprep.subr.mxu0 0.0
      %680 = vmatpush1.msra.mxu0 0.0
      %681 = vmatprep.subr.mxu0 0.0
      %682 = vmatpush1.msra.mxu0 0.0
      %683 = vmatprep.subr.mxu0 0.0
      %684 = vmatpush1.msra.mxu0 0.0
      %685 = vmatprep.subr.mxu0 0.0
      %686 = vmatpush1.msra.mxu0 0.0
      %687 = vmatprep.subr.mxu0 0.0
      %688 = vmatpush1.msra.mxu0 0.0
      %689 = vmatprep.subr.mxu0 0.0
      %690 = vmatpush1.msra.mxu0 0.0
      %691 = vmatprep.subr.mxu0 0.0
      %692 = vmatpush1.msra.mxu0 0.0
      %693 = vmatprep.subr.mxu0 0.0
      %694 = vmatpush1.msra.mxu0 0.0
      %695 = vmatprep.subr.mxu0 0.0
      %696 = vmatpush1.msra.mxu0 0.0
      %697 = vmatprep.subr.mxu0 0.0
      %698 = vmatpush1.msra.mxu0 0.0
      %699 = vmatprep.subr.mxu0 0.0
      %700 = vmatpush1.msra.mxu0 0.0
      %701 = vmatprep.subr.mxu0 0.0
      %702 = vmatpush1.msra.mxu0 0.0
      %703 = vmatprep.subr.mxu0 0.0
      %704 = vmatpush1.msra.mxu0 0.0
      %705 = vmatprep.mubr.f32.mxu0 0.0
      %706 = vmatmul.mubr.f32.gmra.mrb[0].mxu0 %v630
      %v707 = vpop.f32.mrb[0].mxu0
      %v708 = vadd.f32 0.0, %v707
      %v709 = vpop.f32.mrb[0].mxu0
      %v710 = vadd.f32 0.0, %v709
      %711 = vmatprep.mubr.f32.mxu0 0.0
      %712 = vmatmul.mubr.f32.gmra.mrb[0].mxu0 %v633
      %v713 = vpop.f32.mrb[0].mxu0
      %v714 = vadd.f32 0.0, %v713
      %v715 = vpop.f32.mrb[0].mxu0
      %v716 = vadd.f32 0.0, %v715
      %717 = vdwg.mxu0
      %v718 = vadd.f32 %v609, %v708
      %v719 = vadd.f32 %v610, %v710
      %v720 = vadd.f32 %v611, %v714
      %v721 = vadd.f32 %v612, %v716
      %722 = vrot.lane.b32.xlu0 %v171, 110
      %v723 = vpop.permute.xlu0 %722
      %724 = vrot.lane.b32.xlu0 %v173, 110
      %v725 = vpop.permute.xlu0 %724
      %726 = vrot.lane.b32.xlu0 %v172, 110
      %v727 = vpop.permute.xlu0 %726
      %728 = vrot.lane.b32.xlu0 %v174, 110
      %v729 = vpop.permute.xlu0 %728
      %vm730 = vcmp.lt.s32.totalorder %v293, 110
      %v731 = vsel %vm730, %v723, %v727
      %v732 = vsel %vm730, %v725, %v729
      %v733 = vsel %vm730, %v727, %v723
      %v734 = vsel %vm730, %v729, %v725
      %s735 = scalar_lea.vmem %s1, 80
      %v736 = vld [vmem:[%s735] sm:$0xff]
      %v737 = vld [vmem:[%s735 + $0x8] sm:$0xf]
      %v739 = vsel %vm189, %v736, 0
      %v742 = vsel %vm189, %v737, 0
      %v745 = vsel %vm196, %v732, 0
      %v748 = vsel %vm196, %v734, 0
      %750 = vmatprep.subr.mxu0 %v733
      %751 = vmatpush1.msra.mxu0 %v731
      %752 = vmatprep.subr.mxu0 %v748
      %753 = vmatpush1.msra.mxu0 %v745
      %754 = vmatprep.subr.mxu0 0.0
      %755 = vmatpush1.msra.mxu0 0.0
      %756 = vmatprep.subr.mxu0 0.0
      %757 = vmatpush1.msra.mxu0 0.0
      %758 = vmatprep.subr.mxu0 0.0
      %759 = vmatpush1.msra.mxu0 0.0
      %760 = vmatprep.subr.mxu0 0.0
      %761 = vmatpush1.msra.mxu0 0.0
      %762 = vmatprep.subr.mxu0 0.0
      %763 = vmatpush1.msra.mxu0 0.0
      %764 = vmatprep.subr.mxu0 0.0
      %765 = vmatpush1.msra.mxu0 0.0
      %766 = vmatprep.subr.mxu0 0.0
      %767 = vmatpush1.msra.mxu0 0.0
      %768 = vmatprep.subr.mxu0 0.0
      %769 = vmatpush1.msra.mxu0 0.0
      %770 = vmatprep.subr.mxu0 0.0
      %771 = vmatpush1.msra.mxu0 0.0
      %772 = vmatprep.subr.mxu0 0.0
      %773 = vmatpush1.msra.mxu0 0.0
      %774 = vmatprep.subr.mxu0 0.0
      %775 = vmatpush1.msra.mxu0 0.0
      %776 = vmatprep.subr.mxu0 0.0
      %777 = vmatpush1.msra.mxu0 0.0
      %778 = vmatprep.subr.mxu0 0.0
      %779 = vmatpush1.msra.mxu0 0.0
      %780 = vmatprep.subr.mxu0 0.0
      %781 = vmatpush1.msra.mxu0 0.0
      %782 = vmatprep.subr.mxu0 0.0
      %783 = vmatpush1.msra.mxu0 0.0
      %784 = vmatprep.subr.mxu0 0.0
      %785 = vmatpush1.msra.mxu0 0.0
      %786 = vmatprep.subr.mxu0 0.0
      %787 = vmatpush1.msra.mxu0 0.0
      %788 = vmatprep.subr.mxu0 0.0
      %789 = vmatpush1.msra.mxu0 0.0
      %790 = vmatprep.subr.mxu0 0.0
      %791 = vmatpush1.msra.mxu0 0.0
      %792 = vmatprep.subr.mxu0 0.0
      %793 = vmatpush1.msra.mxu0 0.0
      %794 = vmatprep.subr.mxu0 0.0
      %795 = vmatpush1.msra.mxu0 0.0
      %796 = vmatprep.subr.mxu0 0.0
      %797 = vmatpush1.msra.mxu0 0.0
      %798 = vmatprep.subr.mxu0 0.0
      %799 = vmatpush1.msra.mxu0 0.0
      %800 = vmatprep.subr.mxu0 0.0
      %801 = vmatpush1.msra.mxu0 0.0
      %802 = vmatprep.subr.mxu0 0.0
      %803 = vmatpush1.msra.mxu0 0.0
      %804 = vmatprep.subr.mxu0 0.0
      %805 = vmatpush1.msra.mxu0 0.0
      %806 = vmatprep.subr.mxu0 0.0
      %807 = vmatpush1.msra.mxu0 0.0
      %808 = vmatprep.subr.mxu0 0.0
      %809 = vmatpush1.msra.mxu0 0.0
      %810 = vmatprep.subr.mxu0 0.0
      %811 = vmatpush1.msra.mxu0 0.0
      %812 = vmatprep.subr.mxu0 0.0
      %813 = vmatpush1.msra.mxu0 0.0
      %814 = vmatprep.mubr.f32.mxu0 0.0
      %815 = vmatmul.mubr.f32.gmra.mrb[0].mxu0 %v739
      %v816 = vpop.f32.mrb[0].mxu0
      %v817 = vadd.f32 0.0, %v816
      %v818 = vpop.f32.mrb[0].mxu0
      %v819 = vadd.f32 0.0, %v818
      %820 = vmatprep.mubr.f32.mxu0 0.0
      %821 = vmatmul.mubr.f32.gmra.mrb[0].mxu0 %v742
      %v822 = vpop.f32.mrb[0].mxu0
      %v823 = vadd.f32 0.0, %v822
      %v824 = vpop.f32.mrb[0].mxu0
      %v825 = vadd.f32 0.0, %v824
      %826 = vdwg.mxu0
      %v827 = vadd.f32 %v718, %v817
      %v828 = vadd.f32 %v719, %v819
      %v829 = vadd.f32 %v720, %v823
      %v830 = vadd.f32 %v721, %v825
      %831 = vrot.lane.b32.xlu0 %v171, 96
      %v832 = vpop.permute.xlu0 %831
      %833 = vrot.lane.b32.xlu0 %v173, 96
      %v834 = vpop.permute.xlu0 %833
      %835 = vrot.lane.b32.xlu0 %v172, 96
      %v836 = vpop.permute.xlu0 %835
      %837 = vrot.lane.b32.xlu0 %v174, 96
      %v838 = vpop.permute.xlu0 %837
      %vm839 = vcmp.lt.s32.totalorder %v293, 96
      %v840 = vsel %vm839, %v832, %v836
      %v841 = vsel %vm839, %v834, %v838
      %v842 = vsel %vm839, %v836, %v832
      %v843 = vsel %vm839, %v838, %v834
      %s844 = scalar_lea.vmem %s1, 96
      %v845 = vld [vmem:[%s844] sm:$0xff]
      %v846 = vld [vmem:[%s844 + $0x8] sm:$0xf]
      %v848 = vsel %vm189, %v845, 0
      %v851 = vsel %vm189, %v846, 0
      %v854 = vsel %vm196, %v841, 0
      %v857 = vsel %vm196, %v843, 0
      %859 = vmatprep.subr.mxu0 %v842
      %860 = vmatpush1.msra.mxu0 %v840
      %861 = vmatprep.subr.mxu0 %v857
      %862 = vmatpush1.msra.mxu0 %v854
      %863 = vmatprep.subr.mxu0 0.0
      %864 = vmatpush1.msra.mxu0 0.0
      %865 = vmatprep.subr.mxu0 0.0
      %866 = vmatpush1.msra.mxu0 0.0
      %867 = vmatprep.subr.mxu0 0.0
      %868 = vmatpush1.msra.mxu0 0.0
      %869 = vmatprep.subr.mxu0 0.0
      %870 = vmatpush1.msra.mxu0 0.0
      %871 = vmatprep.subr.mxu0 0.0
      %872 = vmatpush1.msra.mxu0 0.0
      %873 = vmatprep.subr.mxu0 0.0
      %874 = vmatpush1.msra.mxu0 0.0
      %875 = vmatprep.subr.mxu0 0.0
      %876 = vmatpush1.msra.mxu0 0.0
      %877 = vmatprep.subr.mxu0 0.0
      %878 = vmatpush1.msra.mxu0 0.0
      %879 = vmatprep.subr.mxu0 0.0
      %880 = vmatpush1.msra.mxu0 0.0
      %881 = vmatprep.subr.mxu0 0.0
      %882 = vmatpush1.msra.mxu0 0.0
      %883 = vmatprep.subr.mxu0 0.0
      %884 = vmatpush1.msra.mxu0 0.0
      %885 = vmatprep.subr.mxu0 0.0
      %886 = vmatpush1.msra.mxu0 0.0
      %887 = vmatprep.subr.mxu0 0.0
      %888 = vmatpush1.msra.mxu0 0.0
      %889 = vmatprep.subr.mxu0 0.0
      %890 = vmatpush1.msra.mxu0 0.0
      %891 = vmatprep.subr.mxu0 0.0
      %892 = vmatpush1.msra.mxu0 0.0
      %893 = vmatprep.subr.mxu0 0.0
      %894 = vmatpush1.msra.mxu0 0.0
      %895 = vmatprep.subr.mxu0 0.0
      %896 = vmatpush1.msra.mxu0 0.0
      %897 = vmatprep.subr.mxu0 0.0
      %898 = vmatpush1.msra.mxu0 0.0
      %899 = vmatprep.subr.mxu0 0.0
      %900 = vmatpush1.msra.mxu0 0.0
      %901 = vmatprep.subr.mxu0 0.0
      %902 = vmatpush1.msra.mxu0 0.0
      %903 = vmatprep.subr.mxu0 0.0
      %904 = vmatpush1.msra.mxu0 0.0
      %905 = vmatprep.subr.mxu0 0.0
      %906 = vmatpush1.msra.mxu0 0.0
      %907 = vmatprep.subr.mxu0 0.0
      %908 = vmatpush1.msra.mxu0 0.0
      %909 = vmatprep.subr.mxu0 0.0
      %910 = vmatpush1.msra.mxu0 0.0
      %911 = vmatprep.subr.mxu0 0.0
      %912 = vmatpush1.msra.mxu0 0.0
      %913 = vmatprep.subr.mxu0 0.0
      %914 = vmatpush1.msra.mxu0 0.0
      %915 = vmatprep.subr.mxu0 0.0
      %916 = vmatpush1.msra.mxu0 0.0
      %917 = vmatprep.subr.mxu0 0.0
      %918 = vmatpush1.msra.mxu0 0.0
      %919 = vmatprep.subr.mxu0 0.0
      %920 = vmatpush1.msra.mxu0 0.0
      %921 = vmatprep.subr.mxu0 0.0
      %922 = vmatpush1.msra.mxu0 0.0
      %923 = vmatprep.mubr.f32.mxu0 0.0
      %924 = vmatmul.mubr.f32.gmra.mrb[0].mxu0 %v848
      %v925 = vpop.f32.mrb[0].mxu0
      %v926 = vadd.f32 0.0, %v925
      %v927 = vpop.f32.mrb[0].mxu0
      %v928 = vadd.f32 0.0, %v927
      %929 = vmatprep.mubr.f32.mxu0 0.0
      %930 = vmatmul.mubr.f32.gmra.mrb[0].mxu0 %v851
      %v931 = vpop.f32.mrb[0].mxu0
      %v932 = vadd.f32 0.0, %v931
      %v933 = vpop.f32.mrb[0].mxu0
      %v934 = vadd.f32 0.0, %v933
      %935 = vdwg.mxu0
      %v936 = vadd.f32 %v827, %v926
      %v937 = vadd.f32 %v828, %v928
      %v938 = vadd.f32 %v829, %v932
      %v939 = vadd.f32 %v830, %v934
      %940 = vrot.lane.b32.xlu0 %v171, 95
      %v941 = vpop.permute.xlu0 %940
      %942 = vrot.lane.b32.xlu0 %v173, 95
      %v943 = vpop.permute.xlu0 %942
      %944 = vrot.lane.b32.xlu0 %v172, 95
      %v945 = vpop.permute.xlu0 %944
      %946 = vrot.lane.b32.xlu0 %v174, 95
      %v947 = vpop.permute.xlu0 %946
      %vm948 = vcmp.lt.s32.totalorder %v293, 95
      %v949 = vsel %vm948, %v941, %v945
      %v950 = vsel %vm948, %v943, %v947
      %v951 = vsel %vm948, %v945, %v941
      %v952 = vsel %vm948, %v947, %v943
      %s953 = scalar_lea.vmem %s1, 112
      %v954 = vld [vmem:[%s953] sm:$0xff]
      %v955 = vld [vmem:[%s953 + $0x8] sm:$0xf]
      %v957 = vsel %vm189, %v954, 0
      %v960 = vsel %vm189, %v955, 0
      %v963 = vsel %vm196, %v950, 0
      %v966 = vsel %vm196, %v952, 0
      %968 = vmatprep.subr.mxu0 %v951
      %969 = vmatpush1.msra.mxu0 %v949
      %970 = vmatprep.subr.mxu0 %v966
      %971 = vmatpush1.msra.mxu0 %v963
      %972 = vmatprep.subr.mxu0 0.0
      %973 = vmatpush1.msra.mxu0 0.0
      %974 = vmatprep.subr.mxu0 0.0
      %975 = vmatpush1.msra.mxu0 0.0
      %976 = vmatprep.subr.mxu0 0.0
      %977 = vmatpush1.msra.mxu0 0.0
      %978 = vmatprep.subr.mxu0 0.0
      %979 = vmatpush1.msra.mxu0 0.0
      %980 = vmatprep.subr.mxu0 0.0
      %981 = vmatpush1.msra.mxu0 0.0
      %982 = vmatprep.subr.mxu0 0.0
      %983 = vmatpush1.msra.mxu0 0.0
      %984 = vmatprep.subr.mxu0 0.0
      %985 = vmatpush1.msra.mxu0 0.0
      %986 = vmatprep.subr.mxu0 0.0
      %987 = vmatpush1.msra.mxu0 0.0
      %988 = vmatprep.subr.mxu0 0.0
      %989 = vmatpush1.msra.mxu0 0.0
      %990 = vmatprep.subr.mxu0 0.0
      %991 = vmatpush1.msra.mxu0 0.0
      %992 = vmatprep.subr.mxu0 0.0
      %993 = vmatpush1.msra.mxu0 0.0
      %994 = vmatprep.subr.mxu0 0.0
      %995 = vmatpush1.msra.mxu0 0.0
      %996 = vmatprep.subr.mxu0 0.0
      %997 = vmatpush1.msra.mxu0 0.0
      %998 = vmatprep.subr.mxu0 0.0
      %999 = vmatpush1.msra.mxu0 0.0
      %1000 = vmatprep.subr.mxu0 0.0
      %1001 = vmatpush1.msra.mxu0 0.0
      %1002 = vmatprep.subr.mxu0 0.0
      %1003 = vmatpush1.msra.mxu0 0.0
      %1004 = vmatprep.subr.mxu0 0.0
      %1005 = vmatpush1.msra.mxu0 0.0
      %1006 = vmatprep.subr.mxu0 0.0
      %1007 = vmatpush1.msra.mxu0 0.0
      %1008 = vmatprep.subr.mxu0 0.0
      %1009 = vmatpush1.msra.mxu0 0.0
      %1010 = vmatprep.subr.mxu0 0.0
      %1011 = vmatpush1.msra.mxu0 0.0
      %1012 = vmatprep.subr.mxu0 0.0
      %1013 = vmatpush1.msra.mxu0 0.0
      %1014 = vmatprep.subr.mxu0 0.0
      %1015 = vmatpush1.msra.mxu0 0.0
      %1016 = vmatprep.subr.mxu0 0.0
      %1017 = vmatpush1.msra.mxu0 0.0
      %1018 = vmatprep.subr.mxu0 0.0
      %1019 = vmatpush1.msra.mxu0 0.0
      %1020 = vmatprep.subr.mxu0 0.0
      %1021 = vmatpush1.msra.mxu0 0.0
      %1022 = vmatprep.subr.mxu0 0.0
      %1023 = vmatpush1.msra.mxu0 0.0
      %1024 = vmatprep.subr.mxu0 0.0
      %1025 = vmatpush1.msra.mxu0 0.0
      %1026 = vmatprep.subr.mxu0 0.0
      %1027 = vmatpush1.msra.mxu0 0.0
      %1028 = vmatprep.subr.mxu0 0.0
      %1029 = vmatpush1.msra.mxu0 0.0
      %1030 = vmatprep.subr.mxu0 0.0
      %1031 = vmatpush1.msra.mxu0 0.0
      %1032 = vmatprep.mubr.f32.mxu0 0.0
      %1033 = vmatmul.mubr.f32.gmra.mrb[0].mxu0 %v957
      %v1034 = vpop.f32.mrb[0].mxu0
      %v1035 = vadd.f32 0.0, %v1034
      %v1036 = vpop.f32.mrb[0].mxu0
      %v1037 = vadd.f32 0.0, %v1036
      %1038 = vmatprep.mubr.f32.mxu0 0.0
      %1039 = vmatmul.mubr.f32.gmra.mrb[0].mxu0 %v960
      %v1040 = vpop.f32.mrb[0].mxu0
      %v1041 = vadd.f32 0.0, %v1040
      %v1042 = vpop.f32.mrb[0].mxu0
      %v1043 = vadd.f32 0.0, %v1042
      %1044 = vdwg.mxu0
      %v1045 = vadd.f32 %v936, %v1035
      %v1046 = vadd.f32 %v937, %v1037
      %v1047 = vadd.f32 %v938, %v1041
      %v1048 = vadd.f32 %v939, %v1043
      %1049 = vrot.lane.b32.xlu0 %v171, 94
      %v1050 = vpop.permute.xlu0 %1049
      %1051 = vrot.lane.b32.xlu0 %v173, 94
      %v1052 = vpop.permute.xlu0 %1051
      %1053 = vrot.lane.b32.xlu0 %v172, 94
      %v1054 = vpop.permute.xlu0 %1053
      %1055 = vrot.lane.b32.xlu0 %v174, 94
      %v1056 = vpop.permute.xlu0 %1055
      %vm1057 = vcmp.lt.s32.totalorder %v293, 94
      %v1058 = vsel %vm1057, %v1050, %v1054
      %v1059 = vsel %vm1057, %v1052, %v1056
      %v1060 = vsel %vm1057, %v1054, %v1050
      %v1061 = vsel %vm1057, %v1056, %v1052
      %s1062 = scalar_lea.vmem %s1, 128
      %v1063 = vld [vmem:[%s1062] sm:$0xff]
      %v1064 = vld [vmem:[%s1062 + $0x8] sm:$0xf]
      %v1066 = vsel %vm189, %v1063, 0
      %v1069 = vsel %vm189, %v1064, 0
      %v1072 = vsel %vm196, %v1059, 0
      %v1075 = vsel %vm196, %v1061, 0
      %1077 = vmatprep.subr.mxu0 %v1060
      %1078 = vmatpush1.msra.mxu0 %v1058
      %1079 = vmatprep.subr.mxu0 %v1075
      %1080 = vmatpush1.msra.mxu0 %v1072
      %1081 = vmatprep.subr.mxu0 0.0
      %1082 = vmatpush1.msra.mxu0 0.0
      %1083 = vmatprep.subr.mxu0 0.0
      %1084 = vmatpush1.msra.mxu0 0.0
      %1085 = vmatprep.subr.mxu0 0.0
      %1086 = vmatpush1.msra.mxu0 0.0
      %1087 = vmatprep.subr.mxu0 0.0
      %1088 = vmatpush1.msra.mxu0 0.0
      %1089 = vmatprep.subr.mxu0 0.0
      %1090 = vmatpush1.msra.mxu0 0.0
      %1091 = vmatprep.subr.mxu0 0.0
      %1092 = vmatpush1.msra.mxu0 0.0
      %1093 = vmatprep.subr.mxu0 0.0
      %1094 = vmatpush1.msra.mxu0 0.0
      %1095 = vmatprep.subr.mxu0 0.0
      %1096 = vmatpush1.msra.mxu0 0.0
      %1097 = vmatprep.subr.mxu0 0.0
      %1098 = vmatpush1.msra.mxu0 0.0
      %1099 = vmatprep.subr.mxu0 0.0
      %1100 = vmatpush1.msra.mxu0 0.0
      %1101 = vmatprep.subr.mxu0 0.0
      %1102 = vmatpush1.msra.mxu0 0.0
      %1103 = vmatprep.subr.mxu0 0.0
      %1104 = vmatpush1.msra.mxu0 0.0
      %1105 = vmatprep.subr.mxu0 0.0
      %1106 = vmatpush1.msra.mxu0 0.0
      %1107 = vmatprep.subr.mxu0 0.0
      %1108 = vmatpush1.msra.mxu0 0.0
      %1109 = vmatprep.subr.mxu0 0.0
      %1110 = vmatpush1.msra.mxu0 0.0
      %1111 = vmatprep.subr.mxu0 0.0
      %1112 = vmatpush1.msra.mxu0 0.0
      %1113 = vmatprep.subr.mxu0 0.0
      %1114 = vmatpush1.msra.mxu0 0.0
      %1115 = vmatprep.subr.mxu0 0.0
      %1116 = vmatpush1.msra.mxu0 0.0
      %1117 = vmatprep.subr.mxu0 0.0
      %1118 = vmatpush1.msra.mxu0 0.0
      %1119 = vmatprep.subr.mxu0 0.0
      %1120 = vmatpush1.msra.mxu0 0.0
      %1121 = vmatprep.subr.mxu0 0.0
      %1122 = vmatpush1.msra.mxu0 0.0
      %1123 = vmatprep.subr.mxu0 0.0
      %1124 = vmatpush1.msra.mxu0 0.0
      %1125 = vmatprep.subr.mxu0 0.0
      %1126 = vmatpush1.msra.mxu0 0.0
      %1127 = vmatprep.subr.mxu0 0.0
      %1128 = vmatpush1.msra.mxu0 0.0
      %1129 = vmatprep.subr.mxu0 0.0
      %1130 = vmatpush1.msra.mxu0 0.0
      %1131 = vmatprep.subr.mxu0 0.0
      %1132 = vmatpush1.msra.mxu0 0.0
      %1133 = vmatprep.subr.mxu0 0.0
      %1134 = vmatpush1.msra.mxu0 0.0
      %1135 = vmatprep.subr.mxu0 0.0
      %1136 = vmatpush1.msra.mxu0 0.0
      %1137 = vmatprep.subr.mxu0 0.0
      %1138 = vmatpush1.msra.mxu0 0.0
      %1139 = vmatprep.subr.mxu0 0.0
      %1140 = vmatpush1.msra.mxu0 0.0
      %1141 = vmatprep.mubr.f32.mxu0 0.0
      %1142 = vmatmul.mubr.f32.gmra.mrb[0].mxu0 %v1066
      %v1143 = vpop.f32.mrb[0].mxu0
      %v1144 = vadd.f32 0.0, %v1143
      %v1145 = vpop.f32.mrb[0].mxu0
      %v1146 = vadd.f32 0.0, %v1145
      %1147 = vmatprep.mubr.f32.mxu0 0.0
      %1148 = vmatmul.mubr.f32.gmra.mrb[0].mxu0 %v1069
      %v1149 = vpop.f32.mrb[0].mxu0
      %v1150 = vadd.f32 0.0, %v1149
      %v1151 = vpop.f32.mrb[0].mxu0
      %v1152 = vadd.f32 0.0, %v1151
      %1153 = vdwg.mxu0
      %v1154 = vadd.f32 %v1045, %v1144
      %v1155 = vadd.f32 %v1046, %v1146
      %v1156 = vadd.f32 %v1047, %v1150
      %v1157 = vadd.f32 %v1048, %v1152
      %v1158 = vtanh.pop %v1154
      %v1159 = vtanh.pop %v1155
      %v1160 = vtanh.pop %v1156
      %v1161 = vtanh.pop %v1157
      %1162 = vst [vmem:[%s170] sm:$0xff] %v1158
      %1163 = vst [vmem:[%s170 + $0x8] sm:$0xff] %v1159
      %1164 = vst [vmem:[%s170 + $0x10] sm:$0xf] %v1160
      %1165 = vst [vmem:[%s170 + $0x18] sm:$0xf] %v1161
      %p1166 = scmp.lt.s32.totalorder %s14, 1
      %s1167 = scalar_select %p1166, %s14, 1
      %s1168 = smul.addr %s1167, 4
      %s1169 = smul.addr %s1168, 8
      %s1170 = scalar_lea.vmem %s3, %s1169
      // Predicated region
      $region33: #{model_tanh_forward.1} parent=31 // pred_check
        %p1171 = pneg %p100
      $region34: #{model_tanh_forward.1} parent=31 // pred_check_branch
        %1173 = sbr.rel (%p1171) target = $region36
      $region35: #{model_tanh_forward.1} parent=31 // pred_region
        _
      $region36: #{model_tanh_forward.1} parent=31 // pred_fallthru
        _
    $region32: #{model_tanh_forward.1} parent=5 // pred_fallthru
      _
    %p1174 = scmp.le.s32.totalorder 2, %s9
    // Predicated region
    $region37: #{model_tanh_forward.1} parent=5 // pred_check
      %p1175 = pneg %p1174
    $region38: #{model_tanh_forward.1} parent=5 // pred_check_branch
      %1177 = sbr.rel (%p1175) target = $region40
    $region39: #{model_tanh_forward.1} parent=5 // pred_region
      %s1178 = ssub.s32 %s9, 2
      // Predicated region
      $region41: #{model_tanh_forward.1} parent=39 // pred_check
        %p1179 = pneg %p106
      $region42: #{model_tanh_forward.1} parent=39 // pred_check_branch
        %1181 = sbr.rel (%p1179) target = $region44
      $region43: #{model_tanh_forward.1} parent=39 // pred_region
        %p1182 = scmp.lt.s32.totalorder %s15, 1
        %s1183 = scalar_select %p1182, %s15, 1
        %s1184 = smul.addr %s1183, 4
        %s1185 = smul.addr %s1184, 8
        %s1186 = scalar_lea.vmem %s3, %s1185
      $region44: #{model_tanh_forward.1} parent=39 // pred_fallthru
        _
    $region40: #{model_tanh_forward.1} parent=5 // pred_fallthru
      _
  $region6: #{model_tanh_forward.1} parent=0 // loop_footer
    %s13 = sadd.s32 1, %s9
  $region7: #{model_tanh_forward.1} parent=0 // loop_footer_branch
    %8 = sbr.rel target = $region3
  $region8: #{model_tanh_forward.1} parent=0 // loop_exit
    _

</llo_original>
